<compile_context>
chip_gen: v6e
topology: v6e:2x2x1
jax: 0.10.0
libtpu: 0.0.40
codegen_flags: <defaults>
</compile_context>

<pallas_src>
import functools

import jax
import jax.numpy as jnp
from jax.experimental import pallas as pl
from jax.experimental.pallas import tpu as pltpu


def _concat_dma_kernel(*refs, channel_offsets, channel_sizes):
    """refs = (*in_hbm_refs, out_hbm_ref, dma_sems).

    Each in_hbm_ref is the full (N, Ci, H, W) input in HBM; out_hbm_ref is the
    full (N, Ctot, H, W) output in HBM.  Issue all DMAs, then wait on all, so
    the independent copies overlap.
    """
    sems = refs[-1]
    out_ref = refs[-2]
    in_refs = refs[:-2]

    copies = []
    for i, (in_ref, off, c) in enumerate(zip(in_refs, channel_offsets, channel_sizes)):
        cp = pltpu.make_async_copy(
            in_ref,                                 # (N, Ci, H, W) in HBM
            out_ref.at[:, off:off + c, :, :],       # strided window of output in HBM
            sems.at[i],
        )
        cp.start()
        copies.append(cp)
    for cp in copies:
        cp.wait()


def concat_channels(xs):
    """Concatenate a list of NCHW arrays along dim=1 using a Pallas TPU DMA kernel."""
    assert len(xs) >= 1
    N, _, H, W = xs[0].shape
    dtype = xs[0].dtype
    for x in xs:
        assert x.ndim == 4
        assert x.shape[0] == N and x.shape[2] == H and x.shape[3] == W
        assert x.dtype == dtype

    channel_sizes = tuple(int(x.shape[1]) for x in xs)
    channel_offsets = []
    acc = 0
    for c in channel_sizes:
        channel_offsets.append(acc)
        acc += c
    c_total = acc

    kernel = functools.partial(
        _concat_dma_kernel,
        channel_offsets=tuple(channel_offsets),
        channel_sizes=channel_sizes,
    )

    return pl.pallas_call(
        kernel,
        out_shape=jax.ShapeDtypeStruct((N, c_total, H, W), dtype),
        # Raw HBM refs: the kernel body does the copies itself via DMA.
        in_specs=[pl.BlockSpec(memory_space=pl.ANY) for _ in xs],
        out_specs=pl.BlockSpec(memory_space=pl.ANY),
        scratch_shapes=[pltpu.SemaphoreType.DMA((len(xs),))],
        # Output is written only via DMA side effects; keep them from being
        # optimized away.
        compiler_params=pltpu.CompilerParams(has_side_effects=True),
    )(*xs)


class Concat:
    """JAX/Pallas equivalent of ultralytics Concat (dimension=1 on the hot path)."""

    def __init__(self, dimension=1):
        self.d = dimension

    def __call__(self, x):
        if self.d == 1 and all(xi.ndim == 4 for xi in x):
            return concat_channels(x)
        # TODO(synk): non-channel / non-4D concat falls back to plain JAX (no dedicated kernel).
        return jnp.concatenate(x, axis=self.d)


if __name__ == "__main__":
    key = jax.random.PRNGKey(0)
    k1, k2, k3 = jax.random.split(key, 3)

    # Small NCHW inputs, typical of a YOLO concat of feature maps.
    x1 = jax.random.normal(k1, (2, 4, 16, 16), dtype=jnp.float32)
    x2 = jax.random.normal(k2, (2, 8, 16, 16), dtype=jnp.float32)
    x3 = jax.random.normal(k3, (2, 4, 16, 16), dtype=jnp.float32)

    module = Concat(dimension=1)
    out = module([x1, x2, x3])
    out = jax.block_until_ready(out)

    ref = jnp.concatenate([x1, x2, x3], axis=1)
    assert out.shape == (2, 16, 16, 16), out.shape
    assert jnp.array_equal(out, ref), "Pallas concat mismatch vs jnp.concatenate"

    print("KERNEL_OK")
</pallas_src>

<mosaic_0001>
module attributes {stable_mosaic.version = 11 : i64} {
  func.func @_concat_dma_kernel(%arg0: memref<2x4x16x16xf32, #tpu.memory_space<any>>, %arg1: memref<2x8x16x16xf32, #tpu.memory_space<any>>, %arg2: memref<2x4x16x16xf32, #tpu.memory_space<any>>, %arg3: memref<2x16x16x16xf32, #tpu.memory_space<any>>, %arg4: memref<3x!tpu.dma_semaphore, #tpu.memory_space<semaphore_mem>>) attributes {dimension_semantics = [], scalar_prefetch = 0 : i64, scratch_operands = 1 : i64, tpu.core_type = #tpu.core_type<tc>} {
    %c0_i32 = arith.constant 0 : i32
    %c0_i32_0 = arith.constant 0 : i32
    %c0_i32_1 = arith.constant 0 : i32
    %c0_i32_2 = arith.constant 0 : i32
    %c0_i32_3 = arith.constant 0 : i32
    %0 = tpu.memref_slice %arg3[%c0_i32_0, %c0_i32_1, %c0_i32_2, %c0_i32_3] : memref<2x16x16x16xf32, #tpu.memory_space<any>> -> memref<2x4x16x16xf32, #tpu.memory_space<any>>
    %1 = tpu.memref_slice %arg4[%c0_i32] : memref<3x!tpu.dma_semaphore, #tpu.memory_space<semaphore_mem>> -> memref<1x!tpu.dma_semaphore, #tpu.memory_space<semaphore_mem>>
    %2 = tpu.memref_squeeze %1 : memref<1x!tpu.dma_semaphore, #tpu.memory_space<semaphore_mem>> -> memref<!tpu.dma_semaphore, #tpu.memory_space<semaphore_mem>>
    tpu.enqueue_dma source(%arg0 : memref<2x4x16x16xf32, #tpu.memory_space<any>>) target(%0 : memref<2x4x16x16xf32, #tpu.memory_space<any>>) target_semaphore(%2 : memref<!tpu.dma_semaphore, #tpu.memory_space<semaphore_mem>>)
    %c1_i32 = arith.constant 1 : i32
    %c0_i32_4 = arith.constant 0 : i32
    %c4_i32 = arith.constant 4 : i32
    %c0_i32_5 = arith.constant 0 : i32
    %c0_i32_6 = arith.constant 0 : i32
    %3 = tpu.memref_slice %arg3[%c0_i32_4, %c4_i32, %c0_i32_5, %c0_i32_6] : memref<2x16x16x16xf32, #tpu.memory_space<any>> -> memref<2x8x16x16xf32, #tpu.memory_space<any>>
    %4 = tpu.memref_slice %arg4[%c1_i32] : memref<3x!tpu.dma_semaphore, #tpu.memory_space<semaphore_mem>> -> memref<1x!tpu.dma_semaphore, #tpu.memory_space<semaphore_mem>>
    %5 = tpu.memref_squeeze %4 : memref<1x!tpu.dma_semaphore, #tpu.memory_space<semaphore_mem>> -> memref<!tpu.dma_semaphore, #tpu.memory_space<semaphore_mem>>
    tpu.enqueue_dma source(%arg1 : memref<2x8x16x16xf32, #tpu.memory_space<any>>) target(%3 : memref<2x8x16x16xf32, #tpu.memory_space<any>>) target_semaphore(%5 : memref<!tpu.dma_semaphore, #tpu.memory_space<semaphore_mem>>)
    %c2_i32 = arith.constant 2 : i32
    %c0_i32_7 = arith.constant 0 : i32
    %c12_i32 = arith.constant 12 : i32
    %c0_i32_8 = arith.constant 0 : i32
    %c0_i32_9 = arith.constant 0 : i32
    %6 = tpu.memref_slice %arg3[%c0_i32_7, %c12_i32, %c0_i32_8, %c0_i32_9] : memref<2x16x16x16xf32, #tpu.memory_space<any>> -> memref<2x4x16x16xf32, #tpu.memory_space<any>>
    %7 = tpu.memref_slice %arg4[%c2_i32] : memref<3x!tpu.dma_semaphore, #tpu.memory_space<semaphore_mem>> -> memref<1x!tpu.dma_semaphore, #tpu.memory_space<semaphore_mem>>
    %8 = tpu.memref_squeeze %7 : memref<1x!tpu.dma_semaphore, #tpu.memory_space<semaphore_mem>> -> memref<!tpu.dma_semaphore, #tpu.memory_space<semaphore_mem>>
    tpu.enqueue_dma source(%arg2 : memref<2x4x16x16xf32, #tpu.memory_space<any>>) target(%6 : memref<2x4x16x16xf32, #tpu.memory_space<any>>) target_semaphore(%8 : memref<!tpu.dma_semaphore, #tpu.memory_space<semaphore_mem>>)
    %c0_i32_10 = arith.constant 0 : i32
    %c0_i32_11 = arith.constant 0 : i32
    %c0_i32_12 = arith.constant 0 : i32
    %c0_i32_13 = arith.constant 0 : i32
    %c0_i32_14 = arith.constant 0 : i32
    %9 = tpu.memref_slice %arg3[%c0_i32_11, %c0_i32_12, %c0_i32_13, %c0_i32_14] : memref<2x16x16x16xf32, #tpu.memory_space<any>> -> memref<2x4x16x16xf32, #tpu.memory_space<any>>
    %10 = tpu.memref_slice %arg4[%c0_i32_10] : memref<3x!tpu.dma_semaphore, #tpu.memory_space<semaphore_mem>> -> memref<1x!tpu.dma_semaphore, #tpu.memory_space<semaphore_mem>>
    %11 = tpu.memref_squeeze %10 : memref<1x!tpu.dma_semaphore, #tpu.memory_space<semaphore_mem>> -> memref<!tpu.dma_semaphore, #tpu.memory_space<semaphore_mem>>
    tpu.wait_dma2 semaphore(%11 : memref<!tpu.dma_semaphore, #tpu.memory_space<semaphore_mem>>) src(%arg0 : memref<2x4x16x16xf32, #tpu.memory_space<any>>) dst(%9 : memref<2x4x16x16xf32, #tpu.memory_space<any>>)
    %c1_i32_15 = arith.constant 1 : i32
    %c0_i32_16 = arith.constant 0 : i32
    %c4_i32_17 = arith.constant 4 : i32
    %c0_i32_18 = arith.constant 0 : i32
    %c0_i32_19 = arith.constant 0 : i32
    %12 = tpu.memref_slice %arg3[%c0_i32_16, %c4_i32_17, %c0_i32_18, %c0_i32_19] : memref<2x16x16x16xf32, #tpu.memory_space<any>> -> memref<2x8x16x16xf32, #tpu.memory_space<any>>
    %13 = tpu.memref_slice %arg4[%c1_i32_15] : memref<3x!tpu.dma_semaphore, #tpu.memory_space<semaphore_mem>> -> memref<1x!tpu.dma_semaphore, #tpu.memory_space<semaphore_mem>>
    %14 = tpu.memref_squeeze %13 : memref<1x!tpu.dma_semaphore, #tpu.memory_space<semaphore_mem>> -> memref<!tpu.dma_semaphore, #tpu.memory_space<semaphore_mem>>
    tpu.wait_dma2 semaphore(%14 : memref<!tpu.dma_semaphore, #tpu.memory_space<semaphore_mem>>) src(%arg1 : memref<2x8x16x16xf32, #tpu.memory_space<any>>) dst(%12 : memref<2x8x16x16xf32, #tpu.memory_space<any>>)
    %c2_i32_20 = arith.constant 2 : i32
    %c0_i32_21 = arith.constant 0 : i32
    %c12_i32_22 = arith.constant 12 : i32
    %c0_i32_23 = arith.constant 0 : i32
    %c0_i32_24 = arith.constant 0 : i32
    %15 = tpu.memref_slice %arg3[%c0_i32_21, %c12_i32_22, %c0_i32_23, %c0_i32_24] : memref<2x16x16x16xf32, #tpu.memory_space<any>> -> memref<2x4x16x16xf32, #tpu.memory_space<any>>
    %16 = tpu.memref_slice %arg4[%c2_i32_20] : memref<3x!tpu.dma_semaphore, #tpu.memory_space<semaphore_mem>> -> memref<1x!tpu.dma_semaphore, #tpu.memory_space<semaphore_mem>>
    %17 = tpu.memref_squeeze %16 : memref<1x!tpu.dma_semaphore, #tpu.memory_space<semaphore_mem>> -> memref<!tpu.dma_semaphore, #tpu.memory_space<semaphore_mem>>
    tpu.wait_dma2 semaphore(%17 : memref<!tpu.dma_semaphore, #tpu.memory_space<semaphore_mem>>) src(%arg2 : memref<2x4x16x16xf32, #tpu.memory_space<any>>) dst(%15 : memref<2x4x16x16xf32, #tpu.memory_space<any>>)
    return
  }
}

</mosaic_0001>

<llo_original>
// kernel: tpu_custom_call.1
$region0: #{tpu_custom_call.1}
  #allocation0 [shape = 'u32[]', space=smem, size = 0x4, offset = 0x4, fixed_abs, tag = 'smem constant byte address 0x4 - core index']
  #allocation1 [shape = 'u32[144,128]{1,0:T(1,128)}', space=vmem, size = 0x12000, scoped, tag = 'internal scratch']
  #allocation2 [shape = 's32[3]{0}', space=sflag, size = 0xc, scoped, tag = 'scratch operand']
  #allocation3 [shape = 's32[]', space=sflag, size = 0x4, offset = 0, fixed_abs, tag = 'sflag constant byte address 0x0 - dummy sync flag']
  #allocation5 [shape = 's32[]', space=sflag, size = 0x4, offset = 0, fixed_abs, tag = 'sflag constant byte address 0x0 - dummy sync flag']
  #allocation7 [shape = 's32[]', space=sflag, size = 0x4, offset = 0, fixed_abs, tag = 'sflag constant byte address 0x0 - dummy sync flag']
  %s0 = inlined_call_operand.hbm [shape: f32[2,4,16,16], index: 0, kind: input, shape index: {}]
  %s1 = inlined_call_operand.hbm [shape: f32[2,8,16,16], index: 1, kind: input, shape index: {}]
  %s2 = inlined_call_operand.hbm [shape: f32[2,4,16,16], index: 2, kind: input, shape index: {}]
  %s3 = inlined_call_operand.hbm [shape: f32[2,16,16,16], index: 3, kind: output, shape index: {}]
  %s4 = sld [smem:[#allocation0]]
  $region2: #{tpu_custom_call.1} parent=0
    _
  %s6 = ssub.s32 1, %s4
  %s7 = scalar_select 0, %s6, %s4
  $region1: #{tpu_custom_call.1} parent=0
    #allocation4 [shape = 'u32[3]{0}', space=smem, size = 0xc, scoped, tag = 'DMA stride descriptor']
    #allocation6 [shape = 'u32[3]{0}', space=smem, size = 0xc, scoped, tag = 'DMA stride descriptor']
    #allocation8 [shape = 'u32[3]{0}', space=smem, size = 0xc, scoped, tag = 'DMA stride descriptor']
    %s9 = sshll.u32 1, 14
    %s10 = sxor.u32 4294967295, %s9
    %14 = sst [smem:[#allocation4]] 1024
    %s15 = scalar_lea.smem [#allocation4], 1
    %16 = sst [smem:[%s15]] 4096
    %s17 = scalar_lea.smem [#allocation4], 2
    %18 = sst [smem:[%s17]] 64
    %20 = dma.general %s0, 2048, %s3, [#allocation2], 131072, [#allocation4], 0, 0
    %s21 = scalar_lea.hbm %s3, 1024
    %s22 = scalar_lea.sflag [#allocation2], 1
    %s24 = sshll.u32 1, 14
    %s25 = sxor.u32 4294967295, %s24
    %29 = sst [smem:[#allocation6]] 2048
    %s30 = scalar_lea.smem [#allocation6], 1
    %31 = sst [smem:[%s30]] 4096
    %s32 = scalar_lea.smem [#allocation6], 2
    %33 = sst [smem:[%s32]] 128
    %35 = dma.general %s1, 4096, %s21, %s22, 131072, [#allocation6], 0, 0
    %s36 = scalar_lea.hbm %s3, 3072
    %s37 = scalar_lea.sflag [#allocation2], 2
    %s39 = sshll.u32 1, 14
    %s40 = sxor.u32 4294967295, %s39
    %44 = sst [smem:[#allocation8]] 1024
    %s45 = scalar_lea.smem [#allocation8], 1
    %46 = sst [smem:[%s45]] 4096
    %s47 = scalar_lea.smem [#allocation8], 2
    %48 = sst [smem:[%s47]] 64
    %50 = dma.general %s2, 2048, %s36, %s37, 131072, [#allocation8], 0, 0
    %s51 = smul.u32 2, 4
    %s52 = smul.u32 %s51, 16
    %s53 = smul.u32 %s52, 1
    %s54 = sshll.u32 %s53, 4
    %55 = dma.done [#allocation2], %s54
    %s56 = smul.u32 2, 8
    %s57 = smul.u32 %s56, 16
    %s58 = smul.u32 %s57, 1
    %s59 = sshll.u32 %s58, 4
    %60 = dma.done %s22, %s59
    %s61 = sshll.u32 %s53, 4
    %62 = dma.done %s37, %s61
  %63 = vsyncmov [#allocation2]
  %s64 = vpop.sfrf %63
  %p65 = scmp.eq.s32.totalorder %s64, 0
  %p66 = pneg %p65
  %68 = shalt.err (%p66)
  %s69 = scalar_lea.sflag [#allocation2], 1
  %70 = vsyncmov %s69
  %s71 = vpop.sfrf %70
  %p72 = scmp.eq.s32.totalorder %s71, 0
  %p73 = pneg %p72
  %75 = shalt.err (%p73)
  %s76 = scalar_lea.sflag [#allocation2], 2
  %77 = vsyncmov %s76
  %s78 = vpop.sfrf %77
  %p79 = scmp.eq.s32.totalorder %s78, 0
  %p80 = pneg %p79
  %82 = shalt.err (%p80)

</llo_original>
